<compile_context>
chip_gen: v7x
topology: tpu7x:2x2x1
jax: 0.10.0
libtpu: 0.0.40
codegen_flags: <defaults>
</compile_context>

<pallas_src>
import jax
import jax.numpy as jnp
from jax.experimental import pallas as pl
from jax.experimental.pallas import tpu as pltpu

# ---------------- model dimensions (small, consistent with the module) ----------------
OUTPUT_DIM = 64          # vocab size (V)
EMB_DIM    = 32          # E
ENC_HID    = 32          # encoder hidden (bidirectional -> 2*ENC_HID features)
DEC_HID    = 32          # D
SRC_LEN    = 8           # S
BATCH      = 8           # padded to the sublane count (8) for full vreg utilization
H2         = 2 * ENC_HID

# packed output slab: [pred(V) | hidden(D) | a(S) | zero pad] -> 128 lanes
OUT_SLAB   = 128
_PAD_LANES = OUT_SLAB - (OUTPUT_DIM + DEC_HID + SRC_LEN)

# lane-tile-aligned bias slab offsets (each segment starts on a 128-lane boundary)
B_ATTN_OFF, B_IH_OFF, B_HH_OFF, B_FC_OFF = 0, 128, 256, 384
BIAS_SLAB = 512


def _decoder_kernel(ids_ref, emb_tab_ref, hid_ref, enc_ref, mask_ref,
                    w_attn_ref, v_ref, w_ih_ref, w_hh_ref, w_fc_ref, b_ref,
                    out_ref):
    B, S, D, HH2, E, V = BATCH, SRC_LEN, DEC_HID, H2, EMB_DIM, OUTPUT_DIM

    # ---- packed biases (single DMA; lane-tile-aligned slices) ----
    b_attn = b_ref[:, B_ATTN_OFF:B_ATTN_OFF + D]          # [1, D]
    b_ih   = b_ref[:, B_IH_OFF:B_IH_OFF + 3 * D]          # [1, 3D]
    b_hh   = b_ref[:, B_HH_OFF:B_HH_OFF + 3 * D]          # [1, 3D]
    b_fc   = b_ref[:, B_FC_OFF:B_FC_OFF + V]               # [1, V]

    h    = hid_ref[...]                                    # [B, D]
    enc2 = enc_ref[...]                                    # [B*S, H2]  (B-major flatten)
    enc3 = enc2.reshape(B, S, HH2)                         # tile-aligned split (S == 8)
    mask = mask_ref[...]                                   # [B, S]

    # ---- embedding lookup as a one-hot MXU matmul (gather kept inside the kernel) ----
    ids = ids_ref[...]                                     # [B, 1] int32
    col = jax.lax.broadcasted_iota(jnp.int32, (B, V), 1)   # [B, V]
    onehot = (ids == col).astype(jnp.float32)              # [B, V]
    emb = jnp.dot(onehot, emb_tab_ref[...],
                  preferred_element_type=jnp.float32)      # [B, E]
    # TODO(synk): dropout treated as identity (eval mode).

    # ---- Bahdanau attention: a = softmax(mask_fill(v . tanh(W [h ; enc]))) ----
    w_ah = w_attn_ref[0:D, :]                              # [D, D]   (pre-transposed, no .T)
    w_ae = w_attn_ref[D:D + HH2, :]                        # [H2, D]
    h_proj = jnp.dot(h, w_ah, preferred_element_type=jnp.float32)       # [B, D]
    e_proj = jnp.dot(enc2, w_ae, preferred_element_type=jnp.float32)    # [B*S, D]
    energy = jnp.tanh(e_proj.reshape(B, S, D) + h_proj[:, None, :] + b_attn)  # [B, S, D]

    # score = energy . v   (tiny lane reduce; fine at this size — would become a matmul if S/B grow)
    score = jnp.sum(energy * v_ref[...], axis=-1)          # [B, S]
    score = jnp.where(mask == 0.0, jnp.float32(-1e10), score)

    score = score - jnp.max(score, axis=-1, keepdims=True)
    esc = jnp.exp(score)
    a = esc / jnp.sum(esc, axis=-1, keepdims=True)         # [B, S]

    # ---- weighted = bmm(a, encoder_outputs) ----
    weighted = jnp.sum(a[:, :, None] * enc3, axis=1)       # [B, H2]

    # ---- GRU single step (PyTorch gate order r, z, n); fused input projection K=96 ----
    x = jnp.concatenate([emb, weighted], axis=-1)          # [B, E+H2] = [B, 96]
    gx = jnp.dot(x, w_ih_ref[...], preferred_element_type=jnp.float32) + b_ih   # [B, 3D]
    gh = jnp.dot(h, w_hh_ref[...], preferred_element_type=jnp.float32) + b_hh   # [B, 3D]
    r = jax.nn.sigmoid(gx[:, 0 * D:1 * D] + gh[:, 0 * D:1 * D])
    z = jax.nn.sigmoid(gx[:, 1 * D:2 * D] + gh[:, 1 * D:2 * D])
    n = jnp.tanh(gx[:, 2 * D:3 * D] + r * gh[:, 2 * D:3 * D])
    h_new = (1.0 - z) * n + z * h                          # [B, D]  (== GRU output for one step)

    # ---- fc_out on cat(output, weighted, embedded): one fused K=128 matmul ----
    feat = jnp.concatenate([h_new, weighted, emb], axis=-1)             # [B, 128]
    pred = jnp.dot(feat, w_fc_ref[...], preferred_element_type=jnp.float32) + b_fc   # [B, V]

    # ---- single lane-dense [B, 128] output slab (one unmasked store, one writeback DMA) ----
    pad = jnp.zeros((B, _PAD_LANES), jnp.float32)
    out_ref[...] = jnp.concatenate([pred, h_new, a, pad], axis=-1)


# ---------------------------------------------------------------------------------------
# Parameters: PyTorch-layout init, then a one-time fuse/transpose into the kernel layout.
# ---------------------------------------------------------------------------------------
def init_torch_params(key):
    ks = jax.random.split(key, 10)
    s = 0.1
    p = {}
    p["embedding"] = s * jax.random.normal(ks[0], (OUTPUT_DIM, EMB_DIM), jnp.float32)
    # attention.attn: Linear(2*ENC_HID + DEC_HID, DEC_HID); cat order (hidden, enc_out)
    p["w_attn"] = s * jax.random.normal(ks[1], (DEC_HID, DEC_HID + H2), jnp.float32)
    p["b_attn"] = s * jax.random.normal(ks[2], (DEC_HID,), jnp.float32)
    # attention.v: Linear(DEC_HID, 1, bias=False)
    p["v"]      = s * jax.random.normal(ks[3], (1, DEC_HID), jnp.float32)
    # rnn = GRU(2*ENC_HID + EMB_DIM, DEC_HID); input cat order (embedded, weighted)
    p["w_ih"]   = s * jax.random.normal(ks[4], (3 * DEC_HID, EMB_DIM + H2), jnp.float32)
    p["w_hh"]   = s * jax.random.normal(ks[5], (3 * DEC_HID, DEC_HID), jnp.float32)
    p["b_ih"]   = s * jax.random.normal(ks[6], (3 * DEC_HID,), jnp.float32)
    p["b_hh"]   = s * jax.random.normal(ks[7], (3 * DEC_HID,), jnp.float32)
    # fc_out = Linear(2*ENC_HID + DEC_HID + EMB_DIM, OUTPUT_DIM); cat order (output, weighted, emb)
    p["w_fc"]   = s * jax.random.normal(ks[8], (OUTPUT_DIM, DEC_HID + H2 + EMB_DIM), jnp.float32)
    p["b_fc"]   = s * jax.random.normal(ks[9], (OUTPUT_DIM,), jnp.float32)
    return p


def fuse_params(p):
    """One-time, zero-runtime-cost layout transform: transpose to [in,out] and concatenate."""
    D, V = DEC_HID, OUTPUT_DIM
    f = {}
    f["emb_table"] = p["embedding"]           # [V, E]
    f["w_attn_T"]  = p["w_attn"].T            # [D+H2, D]: rows 0:D -> hidden, D: -> enc
    f["v"]         = p["v"]                   # [1, D]
    f["w_ih_T"]    = p["w_ih"].T              # [E+H2, 3D]: rows 0:E -> emb, E: -> weighted
    f["w_hh_T"]    = p["w_hh"].T              # [D, 3D]
    f["w_fc_T"]    = p["w_fc"].T              # [D+H2+E, V] = [128, 64]
    b = jnp.zeros((1, BIAS_SLAB), jnp.float32)
    b = b.at[0, B_ATTN_OFF:B_ATTN_OFF + D].set(p["b_attn"])
    b = b.at[0, B_IH_OFF:B_IH_OFF + 3 * D].set(p["b_ih"])
    b = b.at[0, B_HH_OFF:B_HH_OFF + 3 * D].set(p["b_hh"])
    b = b.at[0, B_FC_OFF:B_FC_OFF + V].set(p["b_fc"])
    f["biases"] = b                           # [1, 512]
    return f


# ---------------------------------------------------------------------------------------
# Wrapper: layout plumbing only (fused by jit), then one gridless pallas_call.
# ---------------------------------------------------------------------------------------
def decoder_forward(fused, input_ids, hidden, encoder_outputs, mask):
    B, S = BATCH, SRC_LEN
    # [S, B, H2] -> B-major flat [B*S, H2] (single fused XLA copy; ideally the encoder
    # would emit this layout directly so even this op disappears).
    enc_flat = jnp.transpose(encoder_outputs, (1, 0, 2)).reshape(B * S, H2)
    ids2 = input_ids.reshape(B, 1).astype(jnp.int32)
    mask_f = mask.astype(jnp.float32)

    vmem = pl.BlockSpec(memory_space=pltpu.MemorySpace.VMEM)
    args = (ids2, fused["emb_table"], hidden, enc_flat, mask_f,
            fused["w_attn_T"], fused["v"], fused["w_ih_T"], fused["w_hh_T"],
            fused["w_fc_T"], fused["biases"])

    slab = pl.pallas_call(
        _decoder_kernel,
        out_shape=jax.ShapeDtypeStruct((B, OUT_SLAB), jnp.float32),
        in_specs=[vmem] * len(args),
        out_specs=vmem,
    )(*args)

    pred = slab[:, 0:OUTPUT_DIM]
    h_new = slab[:, OUTPUT_DIM:OUTPUT_DIM + DEC_HID]
    a = slab[:, OUTPUT_DIM + DEC_HID:OUTPUT_DIM + DEC_HID + S]
    return pred, h_new, a


# ---------------------------------------------------------------------------------------
# Pure-JAX reference (PyTorch-layout params) for a correctness check.
# ---------------------------------------------------------------------------------------
def decoder_reference(p, input_ids, hidden, encoder_outputs, mask):
    D = DEC_HID
    emb = p["embedding"][input_ids]                                  # [B, E]
    enc = jnp.transpose(encoder_outputs, (1, 0, 2))                  # [B, S, H2]
    h_rep = jnp.repeat(hidden[:, None, :], SRC_LEN, axis=1)          # [B, S, D]
    energy = jnp.tanh(jnp.concatenate([h_rep, enc], axis=-1) @ p["w_attn"].T + p["b_attn"])
    score = (energy @ p["v"].T)[..., 0]                              # [B, S]
    score = jnp.where(mask == 0, -1e10, score)
    a = jax.nn.softmax(score, axis=-1)
    weighted = jnp.einsum('bs,bsh->bh', a, enc)                      # [B, H2]
    x = jnp.concatenate([emb, weighted], axis=-1)
    gx = x @ p["w_ih"].T + p["b_ih"]
    gh = hidden @ p["w_hh"].T + p["b_hh"]
    r = jax.nn.sigmoid(gx[:, :D] + gh[:, :D])
    z = jax.nn.sigmoid(gx[:, D:2 * D] + gh[:, D:2 * D])
    n = jnp.tanh(gx[:, 2 * D:] + r * gh[:, 2 * D:])
    h_new = (1.0 - z) * n + z * hidden
    pred = jnp.concatenate([h_new, weighted, emb], axis=-1) @ p["w_fc"].T + p["b_fc"]
    return pred, h_new, a


if __name__ == "__main__":
    key = jax.random.PRNGKey(0)
    k_par, k_in, k_hid, k_enc = jax.random.split(key, 4)

    torch_params = init_torch_params(k_par)
    fused_params = fuse_params(torch_params)

    input_ids = jax.random.randint(k_in, (BATCH,), 0, OUTPUT_DIM, dtype=jnp.int32)
    hidden = jax.random.normal(k_hid, (BATCH, DEC_HID), jnp.float32)
    encoder_outputs = jax.random.normal(k_enc, (SRC_LEN, BATCH, H2), jnp.float32)
    # mask: 1 for valid positions, 0 for padding
    mask = jnp.ones((BATCH, SRC_LEN), jnp.float32)
    mask = mask.at[0, SRC_LEN - 2:].set(0.0).at[3, SRC_LEN - 3:].set(0.0)

    fwd = jax.jit(decoder_forward)
    pred, new_hidden, a = fwd(fused_params, input_ids, hidden, encoder_outputs, mask)
    jax.block_until_ready((pred, new_hidden, a))

    # shape + semantics checks
    assert pred.shape == (BATCH, OUTPUT_DIM)
    assert new_hidden.shape == (BATCH, DEC_HID)
    assert a.shape == (BATCH, SRC_LEN)
    assert jnp.allclose(jnp.sum(a, axis=-1), 1.0, atol=1e-5)
    assert jnp.all(a[0, SRC_LEN - 2:] < 1e-6)          # padded positions get ~0 weight

    # numerical check against the pure-JAX reference of the PyTorch module
    pred_r, hid_r, a_r = decoder_reference(torch_params, input_ids, hidden, encoder_outputs, mask)
    assert jnp.allclose(pred, pred_r, atol=1e-4, rtol=1e-4)
    assert jnp.allclose(new_hidden, hid_r, atol=1e-4, rtol=1e-4)
    assert jnp.allclose(a, a_r, atol=1e-4, rtol=1e-4)

    print("KERNEL_OK")
</pallas_src>

<mosaic_0001>
module attributes {stable_mosaic.version = 11 : i64} {
  func.func @_decoder_kernel(%arg0: memref<8x1xi32, #tpu.memory_space<vmem>>, %arg1: memref<64x32xf32, #tpu.memory_space<vmem>>, %arg2: memref<8x32xf32, #tpu.memory_space<vmem>>, %arg3: memref<64x64xf32, #tpu.memory_space<vmem>>, %arg4: memref<8x8xf32, #tpu.memory_space<vmem>>, %arg5: memref<96x32xf32, #tpu.memory_space<vmem>>, %arg6: memref<1x32xf32, #tpu.memory_space<vmem>>, %arg7: memref<96x96xf32, #tpu.memory_space<vmem>>, %arg8: memref<32x96xf32, #tpu.memory_space<vmem>>, %arg9: memref<128x64xf32, #tpu.memory_space<vmem>>, %arg10: memref<1x512xf32, #tpu.memory_space<vmem>>, %arg11: memref<8x128xf32, #tpu.memory_space<vmem>>) attributes {dimension_semantics = [], scalar_prefetch = 0 : i64, scratch_operands = 0 : i64, tpu.core_type = #tpu.core_type<tc>} {
    %c0 = arith.constant 0 : index
    %c0_0 = arith.constant 0 : index
    %0 = vector.load %arg10[%c0, %c0_0] : memref<1x512xf32, #tpu.memory_space<vmem>>, vector<1x32xf32>
    %c0_1 = arith.constant 0 : index
    %c128 = arith.constant 128 : index
    %1 = vector.load %arg10[%c0_1, %c128] : memref<1x512xf32, #tpu.memory_space<vmem>>, vector<1x96xf32>
    %c0_2 = arith.constant 0 : index
    %c256 = arith.constant 256 : index
    %2 = vector.load %arg10[%c0_2, %c256] : memref<1x512xf32, #tpu.memory_space<vmem>>, vector<1x96xf32>
    %c0_3 = arith.constant 0 : index
    %c384 = arith.constant 384 : index
    %3 = vector.load %arg10[%c0_3, %c384] : memref<1x512xf32, #tpu.memory_space<vmem>>, vector<1x64xf32>
    %c0_4 = arith.constant 0 : index
    %c0_5 = arith.constant 0 : index
    %4 = vector.load %arg2[%c0_4, %c0_5] : memref<8x32xf32, #tpu.memory_space<vmem>>, vector<8x32xf32>
    %c0_6 = arith.constant 0 : index
    %c0_7 = arith.constant 0 : index
    %5 = vector.load %arg3[%c0_6, %c0_7] : memref<64x64xf32, #tpu.memory_space<vmem>>, vector<64x64xf32>
    %6 = vector.shape_cast %5 : vector<64x64xf32> to vector<8x8x64xf32>
    %c0_8 = arith.constant 0 : index
    %c0_9 = arith.constant 0 : index
    %7 = vector.load %arg4[%c0_8, %c0_9] : memref<8x8xf32, #tpu.memory_space<vmem>>, vector<8x8xf32>
    %c0_10 = arith.constant 0 : index
    %c0_11 = arith.constant 0 : index
    %8 = vector.load %arg0[%c0_10, %c0_11] : memref<8x1xi32, #tpu.memory_space<vmem>>, vector<8x1xi32>
    %9 = tpu.iota {dimensions = array<i32: 1>} : vector<8x64xi32>
    %10 = vector.broadcast %8 : vector<8x1xi32> to vector<8x64xi32>
    %11 = arith.cmpi eq, %10, %9 : vector<8x64xi32>
    %12 = arith.extui %11 : vector<8x64xi1> to vector<8x64xi32>
    %13 = arith.sitofp %12 : vector<8x64xi32> to vector<8x64xf32>
    %c0_12 = arith.constant 0 : index
    %c0_13 = arith.constant 0 : index
    %14 = vector.load %arg1[%c0_12, %c0_13] : memref<64x32xf32, #tpu.memory_space<vmem>>, vector<64x32xf32>
    %cst = arith.constant dense<0.000000e+00> : vector<8x32xf32>
    %15 = tpu.matmul %13, %14, %cst {dimension_numbers = #tpu.dot_dimension_numbers<[1], [0], [0], [1], [0, 0, 1, 1], [], []>} : vector<8x64xf32>, vector<64x32xf32>, vector<8x32xf32> -> vector<8x32xf32>
    %c0_14 = arith.constant 0 : index
    %c0_15 = arith.constant 0 : index
    %16 = vector.load %arg5[%c0_14, %c0_15] : memref<96x32xf32, #tpu.memory_space<vmem>>, vector<32x32xf32>
    %c32 = arith.constant 32 : index
    %c0_16 = arith.constant 0 : index
    %17 = vector.load %arg5[%c32, %c0_16] : memref<96x32xf32, #tpu.memory_space<vmem>>, vector<64x32xf32>
    %cst_17 = arith.constant dense<0.000000e+00> : vector<8x32xf32>
    %18 = tpu.matmul %4, %16, %cst_17 {dimension_numbers = #tpu.dot_dimension_numbers<[1], [0], [0], [1], [0, 0, 1, 1], [], []>} : vector<8x32xf32>, vector<32x32xf32>, vector<8x32xf32> -> vector<8x32xf32>
    %cst_18 = arith.constant dense<0.000000e+00> : vector<64x32xf32>
    %19 = tpu.matmul %5, %17, %cst_18 {dimension_numbers = #tpu.dot_dimension_numbers<[1], [0], [0], [1], [0, 0, 1, 1], [], []>} : vector<64x64xf32>, vector<64x32xf32>, vector<64x32xf32> -> vector<64x32xf32>
    %20 = vector.shape_cast %19 : vector<64x32xf32> to vector<8x8x32xf32>
    %21 = vector.shape_cast %18 : vector<8x32xf32> to vector<8x1x32xf32>
    %22 = vector.broadcast %21 : vector<8x1x32xf32> to vector<8x8x32xf32>
    %23 = arith.addf %20, %22 : vector<8x8x32xf32>
    %24 = vector.shape_cast %0 : vector<1x32xf32> to vector<1x1x32xf32>
    %25 = vector.broadcast %24 : vector<1x1x32xf32> to vector<8x8x32xf32>
    %26 = arith.addf %23, %25 : vector<8x8x32xf32>
    %27 = math.tanh %26 : vector<8x8x32xf32>
    %c0_19 = arith.constant 0 : index
    %c0_20 = arith.constant 0 : index
    %28 = vector.load %arg6[%c0_19, %c0_20] : memref<1x32xf32, #tpu.memory_space<vmem>>, vector<1x32xf32>
    %29 = vector.shape_cast %28 : vector<1x32xf32> to vector<1x1x32xf32>
    %30 = vector.broadcast %29 : vector<1x1x32xf32> to vector<8x8x32xf32>
    %31 = arith.mulf %27, %30 : vector<8x8x32xf32>
    %cst_21 = arith.constant dense<0.000000e+00> : vector<8x8xf32>
    %32 = vector.multi_reduction <add>, %31, %cst_21 [2] : vector<8x8x32xf32> to vector<8x8xf32>
    %cst_22 = arith.constant 0.000000e+00 : f32
    %33 = vector.broadcast %cst_22 : f32 to vector<8x8xf32>
    %34 = arith.cmpf oeq, %7, %33 : vector<8x8xf32>
    %cst_23 = arith.constant -1.000000e+10 : f32
    %35 = vector.broadcast %cst_23 : f32 to vector<8x8xf32>
    %36 = arith.select %34, %35, %32 : vector<8x8xi1>, vector<8x8xf32>
    %cst_24 = arith.constant dense<0xFF800000> : vector<8xf32>
    %37 = vector.multi_reduction <maximumf>, %36, %cst_24 [1] : vector<8x8xf32> to vector<8xf32>
    %38 = vector.shape_cast %37 : vector<8xf32> to vector<8x1xf32>
    %39 = vector.broadcast %38 : vector<8x1xf32> to vector<8x8xf32>
    %40 = arith.subf %36, %39 : vector<8x8xf32>
    %41 = math.exp %40 : vector<8x8xf32>
    %cst_25 = arith.constant dense<0.000000e+00> : vector<8xf32>
    %42 = vector.multi_reduction <add>, %41, %cst_25 [1] : vector<8x8xf32> to vector<8xf32>
    %43 = vector.shape_cast %42 : vector<8xf32> to vector<8x1xf32>
    %44 = vector.broadcast %43 : vector<8x1xf32> to vector<8x8xf32>
    %45 = arith.divf %41, %44 : vector<8x8xf32>
    %46 = vector.shape_cast %45 : vector<8x8xf32> to vector<8x8x1xf32>
    %47 = vector.broadcast %46 : vector<8x8x1xf32> to vector<8x8x64xf32>
    %48 = arith.mulf %47, %6 : vector<8x8x64xf32>
    %cst_26 = arith.constant dense<0.000000e+00> : vector<8x64xf32>
    %49 = vector.multi_reduction <add>, %48, %cst_26 [1] : vector<8x8x64xf32> to vector<8x64xf32>
    %50 = tpu.concatenate %15, %49 in 1 : vector<8x32xf32>, vector<8x64xf32> -> vector<8x96xf32>
    %c0_27 = arith.constant 0 : index
    %c0_28 = arith.constant 0 : index
    %51 = vector.load %arg7[%c0_27, %c0_28] : memref<96x96xf32, #tpu.memory_space<vmem>>, vector<96x96xf32>
    %cst_29 = arith.constant dense<0.000000e+00> : vector<8x96xf32>
    %52 = tpu.matmul %50, %51, %cst_29 {dimension_numbers = #tpu.dot_dimension_numbers<[1], [0], [0], [1], [0, 0, 1, 1], [], []>} : vector<8x96xf32>, vector<96x96xf32>, vector<8x96xf32> -> vector<8x96xf32>
    %53 = vector.broadcast %1 : vector<1x96xf32> to vector<8x96xf32>
    %54 = arith.addf %52, %53 : vector<8x96xf32>
    %c0_30 = arith.constant 0 : index
    %c0_31 = arith.constant 0 : index
    %55 = vector.load %arg8[%c0_30, %c0_31] : memref<32x96xf32, #tpu.memory_space<vmem>>, vector<32x96xf32>
    %cst_32 = arith.constant dense<0.000000e+00> : vector<8x96xf32>
    %56 = tpu.matmul %4, %55, %cst_32 {dimension_numbers = #tpu.dot_dimension_numbers<[1], [0], [0], [1], [0, 0, 1, 1], [], []>} : vector<8x32xf32>, vector<32x96xf32>, vector<8x96xf32> -> vector<8x96xf32>
    %57 = vector.broadcast %2 : vector<1x96xf32> to vector<8x96xf32>
    %58 = arith.addf %56, %57 : vector<8x96xf32>
    %59 = vector.extract_strided_slice %54 {offsets = [0, 0], sizes = [8, 32], strides = [1, 1]} : vector<8x96xf32> to vector<8x32xf32>
    %60 = vector.extract_strided_slice %58 {offsets = [0, 0], sizes = [8, 32], strides = [1, 1]} : vector<8x96xf32> to vector<8x32xf32>
    %61 = arith.addf %59, %60 : vector<8x32xf32>
    %62 = arith.negf %61 : vector<8x32xf32>
    %63 = math.exp %62 : vector<8x32xf32>
    %cst_33 = arith.constant 1.000000e+00 : f32
    %64 = vector.broadcast %cst_33 : f32 to vector<8x32xf32>
    %65 = arith.addf %64, %63 : vector<8x32xf32>
    %66 = arith.divf %64, %65 : vector<8x32xf32>
    %67 = vector.extract_strided_slice %54 {offsets = [0, 32], sizes = [8, 32], strides = [1, 1]} : vector<8x96xf32> to vector<8x32xf32>
    %68 = vector.extract_strided_slice %58 {offsets = [0, 32], sizes = [8, 32], strides = [1, 1]} : vector<8x96xf32> to vector<8x32xf32>
    %69 = arith.addf %67, %68 : vector<8x32xf32>
    %70 = arith.negf %69 : vector<8x32xf32>
    %71 = math.exp %70 : vector<8x32xf32>
    %cst_34 = arith.constant 1.000000e+00 : f32
    %72 = vector.broadcast %cst_34 : f32 to vector<8x32xf32>
    %73 = arith.addf %72, %71 : vector<8x32xf32>
    %74 = arith.divf %72, %73 : vector<8x32xf32>
    %75 = vector.extract_strided_slice %54 {offsets = [0, 64], sizes = [8, 32], strides = [1, 1]} : vector<8x96xf32> to vector<8x32xf32>
    %76 = vector.extract_strided_slice %58 {offsets = [0, 64], sizes = [8, 32], strides = [1, 1]} : vector<8x96xf32> to vector<8x32xf32>
    %77 = arith.mulf %66, %76 : vector<8x32xf32>
    %78 = arith.addf %75, %77 : vector<8x32xf32>
    %79 = math.tanh %78 : vector<8x32xf32>
    %cst_35 = arith.constant 1.000000e+00 : f32
    %80 = vector.broadcast %cst_35 : f32 to vector<8x32xf32>
    %81 = arith.subf %80, %74 : vector<8x32xf32>
    %82 = arith.mulf %81, %79 : vector<8x32xf32>
    %83 = arith.mulf %74, %4 : vector<8x32xf32>
    %84 = arith.addf %82, %83 : vector<8x32xf32>
    %85 = tpu.concatenate %84, %49, %15 in 1 : vector<8x32xf32>, vector<8x64xf32>, vector<8x32xf32> -> vector<8x128xf32>
    %c0_36 = arith.constant 0 : index
    %c0_37 = arith.constant 0 : index
    %86 = vector.load %arg9[%c0_36, %c0_37] : memref<128x64xf32, #tpu.memory_space<vmem>>, vector<128x64xf32>
    %cst_38 = arith.constant dense<0.000000e+00> : vector<8x64xf32>
    %87 = tpu.matmul %85, %86, %cst_38 {dimension_numbers = #tpu.dot_dimension_numbers<[1], [0], [0], [1], [0, 0, 1, 1], [], []>} : vector<8x128xf32>, vector<128x64xf32>, vector<8x64xf32> -> vector<8x64xf32>
    %88 = vector.broadcast %3 : vector<1x64xf32> to vector<8x64xf32>
    %89 = arith.addf %87, %88 : vector<8x64xf32>
    %cst_39 = arith.constant 0.000000e+00 : f32
    %90 = vector.broadcast %cst_39 : f32 to vector<8x24xf32>
    %91 = tpu.concatenate %89, %84, %45, %90 in 1 : vector<8x64xf32>, vector<8x32xf32>, vector<8x8xf32>, vector<8x24xf32> -> vector<8x128xf32>
    %c0_40 = arith.constant 0 : index
    %c0_41 = arith.constant 0 : index
    %92 = vector.load %arg11[%c0_40, %c0_41] : memref<8x128xf32, #tpu.memory_space<vmem>>, vector<8x128xf32>
    tpu.vector_store %arg11[%c0_40, %c0_41], %91 {strides = array<i32>} : memref<8x128xf32, #tpu.memory_space<vmem>>, vector<8x128xf32>,
    return
  }
}

</mosaic_0001>

<llo_original>
// kernel: decoder_forward.1
$region0: #{decoder_forward.1}
  #allocation0 [shape = 'u32[]', space=smem, size = 0x4, offset = 0x4, fixed_abs, tag = 'smem constant byte address 0x4 - core index']
  #allocation1 [shape = 'u32[144,128]{1,0:T(1,128)}', space=vmem, size = 0x12000, scoped, tag = 'internal scratch']
  %s0 = inlined_call_operand.vmem [shape: s32[8,1], index: 0, kind: input, shape index: {}]
  %s1 = inlined_call_operand.vmem [shape: f32[64,32], index: 1, kind: input, shape index: {}]
  %s2 = inlined_call_operand.vmem [shape: f32[8,32], index: 2, kind: input, shape index: {}]
  %s3 = inlined_call_operand.vmem [shape: f32[64,64], index: 3, kind: input, shape index: {}]
  %s4 = inlined_call_operand.vmem [shape: f32[8,8], index: 4, kind: input, shape index: {}]
  %s5 = inlined_call_operand.vmem [shape: f32[96,32], index: 5, kind: input, shape index: {}]
  %s6 = inlined_call_operand.vmem [shape: f32[1,32], index: 6, kind: input, shape index: {}]
  %s7 = inlined_call_operand.vmem [shape: f32[96,96], index: 7, kind: input, shape index: {}]
  %s8 = inlined_call_operand.vmem [shape: f32[32,96], index: 8, kind: input, shape index: {}]
  %s9 = inlined_call_operand.vmem [shape: f32[128,64], index: 9, kind: input, shape index: {}]
  %s10 = inlined_call_operand.vmem [shape: f32[1,512], index: 10, kind: input, shape index: {}]
  %s11 = inlined_call_operand.vmem [shape: f32[8,128], index: 11, kind: output, shape index: {}]
  %s12 = sld [smem:[#allocation0]]
  $region54: #{decoder_forward.1} parent=0
    _
  %s14 = ssub.s32 1, %s12
  %s15 = scalar_select 0, %s14, %s12
  // Predicated region
  $region2: #{decoder_forward.1} parent=0 // pred_check
    _
  $region3: #{decoder_forward.1} parent=0 // pred_check_branch
    %17 = sbr.rel (0) target = $region5
  $region4: #{decoder_forward.1} parent=0 // pred_region
    _
  $region5: #{decoder_forward.1} parent=0 // pred_fallthru
    _
  // Predicated region
  $region6: #{decoder_forward.1} parent=0 // pred_check
    _
  $region7: #{decoder_forward.1} parent=0 // pred_check_branch
    %19 = sbr.rel (0) target = $region9
  $region8: #{decoder_forward.1} parent=0 // pred_region
    _
  $region9: #{decoder_forward.1} parent=0 // pred_fallthru
    _
  // Predicated region
  $region10: #{decoder_forward.1} parent=0 // pred_check
    _
  $region11: #{decoder_forward.1} parent=0 // pred_check_branch
    %21 = sbr.rel (0) target = $region13
  $region12: #{decoder_forward.1} parent=0 // pred_region
    _
  $region13: #{decoder_forward.1} parent=0 // pred_fallthru
    _
  // Predicated region
  $region14: #{decoder_forward.1} parent=0 // pred_check
    _
  $region15: #{decoder_forward.1} parent=0 // pred_check_branch
    %23 = sbr.rel (0) target = $region17
  $region16: #{decoder_forward.1} parent=0 // pred_region
    _
  $region17: #{decoder_forward.1} parent=0 // pred_fallthru
    _
  // Predicated region
  $region18: #{decoder_forward.1} parent=0 // pred_check
    _
  $region19: #{decoder_forward.1} parent=0 // pred_check_branch
    %25 = sbr.rel (0) target = $region21
  $region20: #{decoder_forward.1} parent=0 // pred_region
    _
  $region21: #{decoder_forward.1} parent=0 // pred_fallthru
    _
  // Predicated region
  $region22: #{decoder_forward.1} parent=0 // pred_check
    _
  $region23: #{decoder_forward.1} parent=0 // pred_check_branch
    %27 = sbr.rel (0) target = $region25
  $region24: #{decoder_forward.1} parent=0 // pred_region
    _
  $region25: #{decoder_forward.1} parent=0 // pred_fallthru
    _
  // Predicated region
  $region26: #{decoder_forward.1} parent=0 // pred_check
    _
  $region27: #{decoder_forward.1} parent=0 // pred_check_branch
    %29 = sbr.rel (0) target = $region29
  $region28: #{decoder_forward.1} parent=0 // pred_region
    _
  $region29: #{decoder_forward.1} parent=0 // pred_fallthru
    _
  // Predicated region
  $region30: #{decoder_forward.1} parent=0 // pred_check
    _
  $region31: #{decoder_forward.1} parent=0 // pred_check_branch
    %31 = sbr.rel (0) target = $region33
  $region32: #{decoder_forward.1} parent=0 // pred_region
    _
  $region33: #{decoder_forward.1} parent=0 // pred_fallthru
    _
  // Predicated region
  $region34: #{decoder_forward.1} parent=0 // pred_check
    _
  $region35: #{decoder_forward.1} parent=0 // pred_check_branch
    %33 = sbr.rel (0) target = $region37
  $region36: #{decoder_forward.1} parent=0 // pred_region
    _
  $region37: #{decoder_forward.1} parent=0 // pred_fallthru
    _
  // Predicated region
  $region38: #{decoder_forward.1} parent=0 // pred_check
    _
  $region39: #{decoder_forward.1} parent=0 // pred_check_branch
    %35 = sbr.rel (0) target = $region41
  $region40: #{decoder_forward.1} parent=0 // pred_region
    _
  $region41: #{decoder_forward.1} parent=0 // pred_fallthru
    _
  // Predicated region
  $region42: #{decoder_forward.1} parent=0 // pred_check
    _
  $region43: #{decoder_forward.1} parent=0 // pred_check_branch
    %37 = sbr.rel (0) target = $region45
  $region44: #{decoder_forward.1} parent=0 // pred_region
    _
  $region45: #{decoder_forward.1} parent=0 // pred_fallthru
    _
  %v38 = vld [vmem:[%s10] sm:$0x1]
  %v39 = vld [vmem:[%s10 + $0x1] sm:$0x1]
  %v40 = vld [vmem:[%s10 + $0x2] sm:$0x1]
  %v41 = vld [vmem:[%s10 + $0x3] sm:$0x1]
  %v42 = vld [vmem:[%s2] sm:$0xff]
  %v43 = vld [vmem:[%s3] sm:$0xff]
  %v44 = vld [vmem:[%s3 + $0x8] sm:$0xff]
  %v45 = vld [vmem:[%s3 + $0x10] sm:$0xff]
  %v46 = vld [vmem:[%s3 + $0x18] sm:$0xff]
  %v47 = vld [vmem:[%s3 + $0x20] sm:$0xff]
  %v48 = vld [vmem:[%s3 + $0x28] sm:$0xff]
  %v49 = vld [vmem:[%s3 + $0x30] sm:$0xff]
  %v50 = vld [vmem:[%s3 + $0x38] sm:$0xff]
  %v51 = vld [vmem:[%s4] sm:$0xff]
  %v52 = vld [vmem:[%s0] sm:$0xff]
  %v53 = vlaneseq
  %v54 = vand.u32 %v53, 127
  %55 = vset.pattern.permute.xlu0 0
  %56 = vperm.xlu0 %55, %v52
  %v57 = vpop.permute.xlu0 %56
  %vm58 = vcmp.eq.s32.totalorder %v57, %v54
  %v59 = vsel %vm58, 1, 0
  %v60 = vcvt.s32.f32 %v59
  %v61 = vld [vmem:[%s1] sm:$0xff]
  %v62 = vld [vmem:[%s1 + $0x8] sm:$0xff]
  %v63 = vld [vmem:[%s1 + $0x10] sm:$0xff]
  %v64 = vld [vmem:[%s1 + $0x18] sm:$0xff]
  %v65 = vld [vmem:[%s1 + $0x20] sm:$0xff]
  %v66 = vld [vmem:[%s1 + $0x28] sm:$0xff]
  %v67 = vld [vmem:[%s1 + $0x30] sm:$0xff]
  %v68 = vld [vmem:[%s1 + $0x38] sm:$0xff]
  %vm69 = vcmask 523264
  %v71 = vsel %vm69, %v60, 0
  %73 = vmatprep.subr.mxu0 0.0
  %74 = vmatpush1.msra.mxu0 %v61
  %75 = vmatprep.subr.mxu0 0.0
  %76 = vmatpush1.msra.mxu0 %v62
  %77 = vmatprep.subr.mxu0 0.0
  %78 = vmatpush1.msra.mxu0 %v63
  %79 = vmatprep.subr.mxu0 0.0
  %80 = vmatpush1.msra.mxu0 %v64
  %81 = vmatprep.subr.mxu0 0.0
  %82 = vmatpush1.msra.mxu0 %v65
  %83 = vmatprep.subr.mxu0 0.0
  %84 = vmatpush1.msra.mxu0 %v66
  %85 = vmatprep.subr.mxu0 0.0
  %86 = vmatpush1.msra.mxu0 %v67
  %87 = vmatprep.subr.mxu0 0.0
  %88 = vmatpush1.msra.mxu0 %v68
  %89 = vmatprep.subr.mxu0 0.0
  %90 = vmatpush1.msra.mxu0 0.0
  %91 = vmatprep.subr.mxu0 0.0
  %92 = vmatpush1.msra.mxu0 0.0
  %93 = vmatprep.subr.mxu0 0.0
  %94 = vmatpush1.msra.mxu0 0.0
  %95 = vmatprep.subr.mxu0 0.0
  %96 = vmatpush1.msra.mxu0 0.0
  %97 = vmatprep.subr.mxu0 0.0
  %98 = vmatpush1.msra.mxu0 0.0
  %99 = vmatprep.subr.mxu0 0.0
  %100 = vmatpush1.msra.mxu0 0.0
  %101 = vmatprep.subr.mxu0 0.0
  %102 = vmatpush1.msra.mxu0 0.0
  %103 = vmatprep.subr.mxu0 0.0
  %104 = vmatpush1.msra.mxu0 0.0
  %105 = vmatprep.subr.mxu0 0.0
  %106 = vmatpush1.msra.mxu0 0.0
  %107 = vmatprep.subr.mxu0 0.0
  %108 = vmatpush1.msra.mxu0 0.0
  %109 = vmatprep.subr.mxu0 0.0
  %110 = vmatpush1.msra.mxu0 0.0
  %111 = vmatprep.subr.mxu0 0.0
  %112 = vmatpush1.msra.mxu0 0.0
  %113 = vmatprep.subr.mxu0 0.0
  %114 = vmatpush1.msra.mxu0 0.0
  %115 = vmatprep.subr.mxu0 0.0
  %116 = vmatpush1.msra.mxu0 0.0
  %117 = vmatprep.subr.mxu0 0.0
  %118 = vmatpush1.msra.mxu0 0.0
  %119 = vmatprep.subr.mxu0 0.0
  %120 = vmatpush1.msra.mxu0 0.0
  %121 = vmatprep.subr.mxu0 0.0
  %122 = vmatpush1.msra.mxu0 0.0
  %123 = vmatprep.subr.mxu0 0.0
  %124 = vmatpush1.msra.mxu0 0.0
  %125 = vmatprep.subr.mxu0 0.0
  %126 = vmatpush1.msra.mxu0 0.0
  %127 = vmatprep.subr.mxu0 0.0
  %128 = vmatpush1.msra.mxu0 0.0
  %129 = vmatprep.subr.mxu0 0.0
  %130 = vmatpush1.msra.mxu0 0.0
  %131 = vmatprep.subr.mxu0 0.0
  %132 = vmatpush1.msra.mxu0 0.0
  %133 = vmatprep.subr.mxu0 0.0
  %134 = vmatpush1.msra.mxu0 0.0
  %135 = vmatprep.subr.mxu0 0.0
  %136 = vmatpush1.msra.mxu0 0.0
  %137 = vmatprep.mubr.f32.mxu0 0.0
  %138 = vmatmul.mubr.f32.gmra.mrb[0].mxu0 %v71
  %v139 = vpop.f32.mrb[0].mxu0
  %v140 = vadd.f32 0.0, %v139
  %v141 = vpop.f32.mrb[0].mxu0
  %142 = vdwg.mxu0
  %v143 = vld [vmem:[%s5] sm:$0xff]
  %v144 = vld [vmem:[%s5 + $0x8] sm:$0xff]
  %v145 = vld [vmem:[%s5 + $0x10] sm:$0xff]
  %v146 = vld [vmem:[%s5 + $0x18] sm:$0xff]
  %v147 = vld [vmem:[%s5 + $0x20] sm:$0xff]
  %v148 = vld [vmem:[%s5 + $0x28] sm:$0xff]
  %v149 = vld [vmem:[%s5 + $0x30] sm:$0xff]
  %v150 = vld [vmem:[%s5 + $0x38] sm:$0xff]
  %v151 = vld [vmem:[%s5 + $0x40] sm:$0xff]
  %v152 = vld [vmem:[%s5 + $0x48] sm:$0xff]
  %v153 = vld [vmem:[%s5 + $0x50] sm:$0xff]
  %v154 = vld [vmem:[%s5 + $0x58] sm:$0xff]
  %vm155 = vcmask 261120
  %v157 = vsel %vm155, %v42, 0
  %159 = vmatprep.subr.mxu0 0.0
  %160 = vmatpush1.msra.mxu0 %v143
  %161 = vmatprep.subr.mxu0 0.0
  %162 = vmatpush1.msra.mxu0 %v144
  %163 = vmatprep.subr.mxu0 0.0
  %164 = vmatpush1.msra.mxu0 %v145
  %165 = vmatprep.subr.mxu0 0.0
  %166 = vmatpush1.msra.mxu0 %v146
  %167 = vmatprep.subr.mxu0 0.0
  %168 = vmatpush1.msra.mxu0 0.0
  %169 = vmatprep.subr.mxu0 0.0
  %170 = vmatpush1.msra.mxu0 0.0
  %171 = vmatprep.subr.mxu0 0.0
  %172 = vmatpush1.msra.mxu0 0.0
  %173 = vmatprep.subr.mxu0 0.0
  %174 = vmatpush1.msra.mxu0 0.0
  %175 = vmatprep.subr.mxu0 0.0
  %176 = vmatpush1.msra.mxu0 0.0
  %177 = vmatprep.subr.mxu0 0.0
  %178 = vmatpush1.msra.mxu0 0.0
  %179 = vmatprep.subr.mxu0 0.0
  %180 = vmatpush1.msra.mxu0 0.0
  %181 = vmatprep.subr.mxu0 0.0
  %182 = vmatpush1.msra.mxu0 0.0
  %183 = vmatprep.subr.mxu0 0.0
  %184 = vmatpush1.msra.mxu0 0.0
  %185 = vmatprep.subr.mxu0 0.0
  %186 = vmatpush1.msra.mxu0 0.0
  %187 = vmatprep.subr.mxu0 0.0
  %188 = vmatpush1.msra.mxu0 0.0
  %189 = vmatprep.subr.mxu0 0.0
  %190 = vmatpush1.msra.mxu0 0.0
  %191 = vmatprep.subr.mxu0 0.0
  %192 = vmatpush1.msra.mxu0 0.0
  %193 = vmatprep.subr.mxu0 0.0
  %194 = vmatpush1.msra.mxu0 0.0
  %195 = vmatprep.subr.mxu0 0.0
  %196 = vmatpush1.msra.mxu0 0.0
  %197 = vmatprep.subr.mxu0 0.0
  %198 = vmatpush1.msra.mxu0 0.0
  %199 = vmatprep.subr.mxu0 0.0
  %200 = vmatpush1.msra.mxu0 0.0
  %201 = vmatprep.subr.mxu0 0.0
  %202 = vmatpush1.msra.mxu0 0.0
  %203 = vmatprep.subr.mxu0 0.0
  %204 = vmatpush1.msra.mxu0 0.0
  %205 = vmatprep.subr.mxu0 0.0
  %206 = vmatpush1.msra.mxu0 0.0
  %207 = vmatprep.subr.mxu0 0.0
  %208 = vmatpush1.msra.mxu0 0.0
  %209 = vmatprep.subr.mxu0 0.0
  %210 = vmatpush1.msra.mxu0 0.0
  %211 = vmatprep.subr.mxu0 0.0
  %212 = vmatpush1.msra.mxu0 0.0
  %213 = vmatprep.subr.mxu0 0.0
  %214 = vmatpush1.msra.mxu0 0.0
  %215 = vmatprep.subr.mxu0 0.0
  %216 = vmatpush1.msra.mxu0 0.0
  %217 = vmatprep.subr.mxu0 0.0
  %218 = vmatpush1.msra.mxu0 0.0
  %219 = vmatprep.subr.mxu0 0.0
  %220 = vmatpush1.msra.mxu0 0.0
  %221 = vmatprep.subr.mxu0 0.0
  %222 = vmatpush1.msra.mxu0 0.0
  %223 = vmatprep.mubr.f32.mxu0 0.0
  %224 = vmatmul.mubr.f32.gmra.mrb[0].mxu0 %v157
  %v225 = vpop.f32.mrb[0].mxu0
  %v226 = vadd.f32 0.0, %v225
  %v227 = vpop.f32.mrb[0].mxu0
  %228 = vdwg.mxu0
  %v230 = vsel %vm69, %v43, 0
  %v233 = vsel %vm69, %v44, 0
  %v236 = vsel %vm69, %v45, 0
  %v239 = vsel %vm69, %v46, 0
  %v242 = vsel %vm69, %v47, 0
  %v245 = vsel %vm69, %v48, 0
  %v248 = vsel %vm69, %v49, 0
  %v251 = vsel %vm69, %v50, 0
  %253 = vmatprep.subr.mxu0 0.0
  %254 = vmatpush1.msra.mxu0 %v147
  %255 = vmatprep.subr.mxu0 0.0
  %256 = vmatpush1.msra.mxu0 %v148
  %257 = vmatprep.subr.mxu0 0.0
  %258 = vmatpush1.msra.mxu0 %v149
  %259 = vmatprep.subr.mxu0 0.0
  %260 = vmatpush1.msra.mxu0 %v150
  %261 = vmatprep.subr.mxu0 0.0
  %262 = vmatpush1.msra.mxu0 %v151
  %263 = vmatprep.subr.mxu0 0.0
  %264 = vmatpush1.msra.mxu0 %v152
  %265 = vmatprep.subr.mxu0 0.0
  %266 = vmatpush1.msra.mxu0 %v153
  %267 = vmatprep.subr.mxu0 0.0
  %268 = vmatpush1.msra.mxu0 %v154
  %269 = vmatprep.subr.mxu0 0.0
  %270 = vmatpush1.msra.mxu0 0.0
  %271 = vmatprep.subr.mxu0 0.0
  %272 = vmatpush1.msra.mxu0 0.0
  %273 = vmatprep.subr.mxu0 0.0
  %274 = vmatpush1.msra.mxu0 0.0
  %275 = vmatprep.subr.mxu0 0.0
  %276 = vmatpush1.msra.mxu0 0.0
  %277 = vmatprep.subr.mxu0 0.0
  %278 = vmatpush1.msra.mxu0 0.0
  %279 = vmatprep.subr.mxu0 0.0
  %280 = vmatpush1.msra.mxu0 0.0
  %281 = vmatprep.subr.mxu0 0.0
  %282 = vmatpush1.msra.mxu0 0.0
  %283 = vmatprep.subr.mxu0 0.0
  %284 = vmatpush1.msra.mxu0 0.0
  %285 = vmatprep.subr.mxu0 0.0
  %286 = vmatpush1.msra.mxu0 0.0
  %287 = vmatprep.subr.mxu0 0.0
  %288 = vmatpush1.msra.mxu0 0.0
  %289 = vmatprep.subr.mxu0 0.0
  %290 = vmatpush1.msra.mxu0 0.0
  %291 = vmatprep.subr.mxu0 0.0
  %292 = vmatpush1.msra.mxu0 0.0
  %293 = vmatprep.subr.mxu0 0.0
  %294 = vmatpush1.msra.mxu0 0.0
  %295 = vmatprep.subr.mxu0 0.0
  %296 = vmatpush1.msra.mxu0 0.0
  %297 = vmatprep.subr.mxu0 0.0
  %298 = vmatpush1.msra.mxu0 0.0
  %299 = vmatprep.subr.mxu0 0.0
  %300 = vmatpush1.msra.mxu0 0.0
  %301 = vmatprep.subr.mxu0 0.0
  %302 = vmatpush1.msra.mxu0 0.0
  %303 = vmatprep.subr.mxu0 0.0
  %304 = vmatpush1.msra.mxu0 0.0
  %305 = vmatprep.subr.mxu0 0.0
  %306 = vmatpush1.msra.mxu0 0.0
  %307 = vmatprep.subr.mxu0 0.0
  %308 = vmatpush1.msra.mxu0 0.0
  %309 = vmatprep.subr.mxu0 0.0
  %310 = vmatpush1.msra.mxu0 0.0
  %311 = vmatprep.subr.mxu0 0.0
  %312 = vmatpush1.msra.mxu0 0.0
  %313 = vmatprep.subr.mxu0 0.0
  %314 = vmatpush1.msra.mxu0 0.0
  %315 = vmatprep.subr.mxu0 0.0
  %316 = vmatpush1.msra.mxu0 0.0
  %317 = vmatprep.mubr.f32.mxu0 0.0
  %318 = vmatmul.mubr.f32.gmra.mrb[0].mxu0 %v230
  %v319 = vpop.f32.mrb[0].mxu0
  %v320 = vadd.f32 0.0, %v319
  %v321 = vpop.f32.mrb[0].mxu0
  %322 = vmatprep.mubr.f32.mxu0 0.0
  %323 = vmatmul.mubr.f32.gmra.mrb[0].mxu0 %v233
  %v324 = vpop.f32.mrb[0].mxu0
  %v325 = vadd.f32 0.0, %v324
  %v326 = vpop.f32.mrb[0].mxu0
  %327 = vmatprep.mubr.f32.mxu0 0.0
  %328 = vmatmul.mubr.f32.gmra.mrb[0].mxu0 %v236
  %v329 = vpop.f32.mrb[0].mxu0
  %v330 = vadd.f32 0.0, %v329
  %v331 = vpop.f32.mrb[0].mxu0
  %332 = vmatprep.mubr.f32.mxu0 0.0
  %333 = vmatmul.mubr.f32.gmra.mrb[0].mxu0 %v239
  %v334 = vpop.f32.mrb[0].mxu0
  %v335 = vadd.f32 0.0, %v334
  %v336 = vpop.f32.mrb[0].mxu0
  %337 = vmatprep.mubr.f32.mxu0 0.0
  %338 = vmatmul.mubr.f32.gmra.mrb[0].mxu0 %v242
  %v339 = vpop.f32.mrb[0].mxu0
  %v340 = vadd.f32 0.0, %v339
  %v341 = vpop.f32.mrb[0].mxu0
  %342 = vmatprep.mubr.f32.mxu0 0.0
  %343 = vmatmul.mubr.f32.gmra.mrb[0].mxu0 %v245
  %v344 = vpop.f32.mrb[0].mxu0
  %v345 = vadd.f32 0.0, %v344
  %v346 = vpop.f32.mrb[0].mxu0
  %347 = vmatprep.mubr.f32.mxu0 0.0
  %348 = vmatmul.mubr.f32.gmra.mrb[0].mxu0 %v248
  %v349 = vpop.f32.mrb[0].mxu0
  %v350 = vadd.f32 0.0, %v349
  %v351 = vpop.f32.mrb[0].mxu0
  %352 = vmatprep.mubr.f32.mxu0 0.0
  %353 = vmatmul.mubr.f32.gmra.mrb[0].mxu0 %v251
  %v354 = vpop.f32.mrb[0].mxu0
  %v355 = vadd.f32 0.0, %v354
  %v356 = vpop.f32.mrb[0].mxu0
  %357 = vdwg.mxu0
  %v359 = vcombine.high %v226, %v226
  %v361 = vunpack.c.l.s4 1966171168
  %v362 = vunpack.c.0.s8 %v361
  %v363 = vlaneseq
  %v364 = vshrl.u32 %v363, 7
  %v365 = vsub.s32 %v362, %v364
  %v366 = vrot.slane %v226, %v365
  %v368 = vunpack.c.l.s4 1966171168
  %v369 = vunpack.c.0.s8 %v368
  %v370 = vlaneseq
  %v371 = vshrl.u32 %v370, 7
  %v372 = vsub.s32 %v369, %v371
  %v373 = vrot.slane %v359, %v372
  %v374 = vcombine.high %v366, %v366
  %v375 = vcombine.high %v373, %v373
  %v377 = vunpack.c.l.s4 1966171168
  %v378 = vunpack.c.0.s8 %v377
  %v379 = vlaneseq
  %v380 = vshrl.u32 %v379, 7
  %v381 = vsub.s32 %v378, %v380
  %v382 = vrot.slane %v366, %v381
  %v384 = vunpack.c.l.s4 1966171168
  %v385 = vunpack.c.0.s8 %v384
  %v386 = vlaneseq
  %v387 = vshrl.u32 %v386, 7
  %v388 = vsub.s32 %v385, %v387
  %v389 = vrot.slane %v373, %v388
  %v391 = vunpack.c.l.s4 1966171168
  %v392 = vunpack.c.0.s8 %v391
  %v393 = vlaneseq
  %v394 = vshrl.u32 %v393, 7
  %v395 = vsub.s32 %v392, %v394
  %v396 = vrot.slane %v374, %v395
  %v398 = vunpack.c.l.s4 1966171168
  %v399 = vunpack.c.0.s8 %v398
  %v400 = vlaneseq
  %v401 = vshrl.u32 %v400, 7
  %v402 = vsub.s32 %v399, %v401
  %v403 = vrot.slane %v375, %v402
  %v404 = vcombine.high %v382, %v382
  %v405 = vcombine.high %v389, %v389
  %v406 = vcombine.high %v396, %v396
  %v407 = vcombine.high %v403, %v403
  %v408 = vlaneseq
  %v409 = vshrl.u32 %v408, 7
  %v410 = vsub.s32 0, %v409
  %v411 = vrot.slane %v382, %v410
  %v412 = vlaneseq
  %v413 = vshrl.u32 %v412, 7
  %v414 = vsub.s32 0, %v413
  %v415 = vrot.slane %v396, %v414
  %v416 = vlaneseq
  %v417 = vshrl.u32 %v416, 7
  %v418 = vsub.s32 0, %v417
  %v419 = vrot.slane %v404, %v418
  %v420 = vlaneseq
  %v421 = vshrl.u32 %v420, 7
  %v422 = vsub.s32 0, %v421
  %v423 = vrot.slane %v406, %v422
  %v424 = vlaneseq
  %v425 = vshrl.u32 %v424, 7
  %v426 = vsub.s32 0, %v425
  %v427 = vrot.slane %v389, %v426
  %v428 = vlaneseq
  %v429 = vshrl.u32 %v428, 7
  %v430 = vsub.s32 0, %v429
  %v431 = vrot.slane %v403, %v430
  %v432 = vlaneseq
  %v433 = vshrl.u32 %v432, 7
  %v434 = vsub.s32 0, %v433
  %v435 = vrot.slane %v405, %v434
  %v436 = vlaneseq
  %v437 = vshrl.u32 %v436, 7
  %v438 = vsub.s32 0, %v437
  %v439 = vrot.slane %v407, %v438
  %v448 = vadd.f32 %v320, %v411
  %v449 = vadd.f32 %v325, %v415
  %v450 = vadd.f32 %v330, %v419
  %v451 = vadd.f32 %v335, %v423
  %v452 = vadd.f32 %v340, %v427
  %v453 = vadd.f32 %v345, %v431
  %v454 = vadd.f32 %v350, %v435
  %v455 = vadd.f32 %v355, %v439
  %v457 = vlaneseq
  %v458 = vshrl.u32 %v457, 7
  %v459 = vsub.s32 0, %v458
  %v460 = vrot.slane %v38, %v459
  %v462 = vadd.f32 %v448, %v460
  %v463 = vadd.f32 %v449, %v460
  %v464 = vadd.f32 %v450, %v460
  %v465 = vadd.f32 %v451, %v460
  %v466 = vadd.f32 %v452, %v460
  %v467 = vadd.f32 %v453, %v460
  %v468 = vadd.f32 %v454, %v460
  %v469 = vadd.f32 %v455, %v460
  %v470 = vtanh.pop %v462
  %v471 = vtanh.pop %v463
  %v472 = vtanh.pop %v464
  %v473 = vtanh.pop %v465
  %v474 = vtanh.pop %v466
  %v475 = vtanh.pop %v467
  %v476 = vtanh.pop %v468
  %v477 = vtanh.pop %v469
  %v478 = vld [vmem:[%s6] sm:$0x1]
  %v480 = vlaneseq
  %v481 = vshrl.u32 %v480, 7
  %v482 = vsub.s32 0, %v481
  %v483 = vrot.slane %v478, %v482
  %v485 = vmul.f32 %v470, %v483
  %v486 = vmul.f32 %v471, %v483
  %v487 = vmul.f32 %v472, %v483
  %v488 = vmul.f32 %v473, %v483
  %v489 = vmul.f32 %v474, %v483
  %v490 = vmul.f32 %v475, %v483
  %v491 = vmul.f32 %v476, %v483
  %v492 = vmul.f32 %v477, %v483
  %v493 = vsel %vm155, %v485, 0.0
  %494 = vadd.xlane.f32.xlu0 %v493
  %v495 = vpop.xlane.xlu0 %494
  %v496 = vsel %vm155, %v486, 0.0
  %497 = vadd.xlane.f32.xlu0 %v496
  %v498 = vpop.xlane.xlu0 %497
  %v499 = vsel %vm155, %v487, 0.0
  %500 = vadd.xlane.f32.xlu0 %v499
  %v501 = vpop.xlane.xlu0 %500
  %v502 = vsel %vm155, %v488, 0.0
  %503 = vadd.xlane.f32.xlu0 %v502
  %v504 = vpop.xlane.xlu0 %503
  %v505 = vsel %vm155, %v489, 0.0
  %506 = vadd.xlane.f32.xlu0 %v505
  %v507 = vpop.xlane.xlu0 %506
  %v508 = vsel %vm155, %v490, 0.0
  %509 = vadd.xlane.f32.xlu0 %v508
  %v510 = vpop.xlane.xlu0 %509
  %v511 = vsel %vm155, %v491, 0.0
  %512 = vadd.xlane.f32.xlu0 %v511
  %v513 = vpop.xlane.xlu0 %512
  %v514 = vsel %vm155, %v492, 0.0
  %515 = vadd.xlane.f32.xlu0 %v514
  %v516 = vpop.xlane.xlu0 %515
  %vm517 = vcmp.eq.f32.partialorder %v51, 0.0
  %v526 = vlaneseq
  %v527 = vshrl.u32 %v526, 7
  %v528 = vsub.s32 %v54, %v527
  %v529 = vrot.slane %v495, %v528
  %v530 = vlaneseq
  %v531 = vshrl.u32 %v530, 7
  %v532 = vsub.s32 %v54, %v531
  %v533 = vrot.slane %v498, %v532
  %v534 = vlaneseq
  %v535 = vshrl.u32 %v534, 7
  %v536 = vsub.s32 %v54, %v535
  %v537 = vrot.slane %v501, %v536
  %v538 = vlaneseq
  %v539 = vshrl.u32 %v538, 7
  %v540 = vsub.s32 %v54, %v539
  %v541 = vrot.slane %v504, %v540
  %v542 = vlaneseq
  %v543 = vshrl.u32 %v542, 7
  %v544 = vsub.s32 %v54, %v543
  %v545 = vrot.slane %v507, %v544
  %v546 = vlaneseq
  %v547 = vshrl.u32 %v546, 7
  %v548 = vsub.s32 %v54, %v547
  %v549 = vrot.slane %v510, %v548
  %v550 = vlaneseq
  %v551 = vshrl.u32 %v550, 7
  %v552 = vsub.s32 %v54, %v551
  %v553 = vrot.slane %v513, %v552
  %v554 = vlaneseq
  %v555 = vshrl.u32 %v554, 7
  %v556 = vsub.s32 %v54, %v555
  %v557 = vrot.slane %v516, %v556
  %vm558 = vcmask 1041409
  %v559 = vsel %vm558, %v533, %v529
  %vm560 = vcmask 1042434
  %v561 = vsel %vm560, %v537, %v559
  %vm562 = vcmask 1043459
  %v563 = vsel %vm562, %v541, %v561
  %vm564 = vcmask 1044484
  %v565 = vsel %vm564, %v545, %v563
  %vm566 = vcmask 1045509
  %v567 = vsel %vm566, %v549, %v565
  %vm568 = vcmask 1046534
  %v569 = vsel %vm568, %v553, %v567
  %vm570 = vcmask 1047559
  %v571 = vsel %vm570, %v557, %v569
  %v573 = vsel %vm517, -1e+10, %v571
  %vm574 = vcmask 64512
  %v575 = vsel %vm574, %v573, -inf
  %576 = vmax.xlane.f32.xlu0 %v575
  %v577 = vpop.xlane.xlu0 %576
  %v578 = vsub.f32 %v573, %v577
  %v579 = vmul.f32 %v578, 1.442695
  %v580 = vpow.pop %v579
  %v581 = vsel %vm574, %v580, 0.0
  %582 = vadd.xlane.f32.xlu0 %v581
  %v583 = vpop.xlane.xlu0 %582
  %v584 = vrcp.pop %v583
  %v585 = vmul.f32 %v580, %v584
  %v586 = vlaneseq
  %v587 = vshrl.u32 %v586, 7
  %v588 = vsub.s32 0, %v587
  %v589 = vrot.slane %v585, %v588
  %591 = vbcast.lane.b32.xlu0 %v589, 256
  %v592 = vpop.permute.xlu0 %591
  %v593 = vlaneseq
  %v594 = vshrl.u32 %v593, 7
  %v595 = vsub.s32 1, %v594
  %v596 = vrot.slane %v585, %v595
  %598 = vbcast.lane.b32.xlu0 %v596, 256
  %v599 = vpop.permute.xlu0 %598
  %v600 = vlaneseq
  %v601 = vshrl.u32 %v600, 7
  %v602 = vsub.s32 2, %v601
  %v603 = vrot.slane %v585, %v602
  %605 = vbcast.lane.b32.xlu0 %v603, 256
  %v606 = vpop.permute.xlu0 %605
  %v607 = vlaneseq
  %v608 = vshrl.u32 %v607, 7
  %v609 = vsub.s32 3, %v608
  %v610 = vrot.slane %v585, %v609
  %612 = vbcast.lane.b32.xlu0 %v610, 256
  %v613 = vpop.permute.xlu0 %612
  %v614 = vlaneseq
  %v615 = vshrl.u32 %v614, 7
  %v616 = vsub.s32 4, %v615
  %v617 = vrot.slane %v585, %v616
  %619 = vbcast.lane.b32.xlu0 %v617, 256
  %v620 = vpop.permute.xlu0 %619
  %v621 = vlaneseq
  %v622 = vshrl.u32 %v621, 7
  %v623 = vsub.s32 5, %v622
  %v624 = vrot.slane %v585, %v623
  %626 = vbcast.lane.b32.xlu0 %v624, 256
  %v627 = vpop.permute.xlu0 %626
  %v628 = vlaneseq
  %v629 = vshrl.u32 %v628, 7
  %v630 = vsub.s32 6, %v629
  %v631 = vrot.slane %v585, %v630
  %633 = vbcast.lane.b32.xlu0 %v631, 256
  %v634 = vpop.permute.xlu0 %633
  %v635 = vlaneseq
  %v636 = vshrl.u32 %v635, 7
  %v637 = vsub.s32 7, %v636
  %v638 = vrot.slane %v585, %v637
  %640 = vbcast.lane.b32.xlu0 %v638, 256
  %v641 = vpop.permute.xlu0 %640
  %v642 = vmul.f32 %v592, %v43
  %v643 = vmul.f32 %v599, %v44
  %v644 = vmul.f32 %v606, %v45
  %v645 = vmul.f32 %v613, %v46
  %v646 = vmul.f32 %v620, %v47
  %v647 = vmul.f32 %v627, %v48
  %v648 = vmul.f32 %v634, %v49
  %v649 = vmul.f32 %v641, %v50
  %v650 = vsel %vm69, %v642, 0.0
  %v651 = vrot.slane %v650, 4
  %v652 = vadd.f32 %v650, %v651
  %v653 = vrot.slane %v652, 2
  %v654 = vadd.f32 %v652, %v653
  %v655 = vrot.slane %v654, 1
  %v656 = vadd.f32 %v654, %v655
  %v657 = vsel %vm69, %v643, 0.0
  %v658 = vrot.slane %v657, 4
  %v659 = vadd.f32 %v657, %v658
  %v660 = vrot.slane %v659, 2
  %v661 = vadd.f32 %v659, %v660
  %v662 = vrot.slane %v661, 1
  %v663 = vadd.f32 %v661, %v662
  %v664 = vsel %vm69, %v644, 0.0
  %v665 = vrot.slane %v664, 4
  %v666 = vadd.f32 %v664, %v665
  %v667 = vrot.slane %v666, 2
  %v668 = vadd.f32 %v666, %v667
  %v669 = vrot.slane %v668, 1
  %v670 = vadd.f32 %v668, %v669
  %v671 = vsel %vm69, %v645, 0.0
  %v672 = vrot.slane %v671, 4
  %v673 = vadd.f32 %v671, %v672
  %v674 = vrot.slane %v673, 2
  %v675 = vadd.f32 %v673, %v674
  %v676 = vrot.slane %v675, 1
  %v677 = vadd.f32 %v675, %v676
  %v678 = vsel %vm69, %v646, 0.0
  %v679 = vrot.slane %v678, 4
  %v680 = vadd.f32 %v678, %v679
  %v681 = vrot.slane %v680, 2
  %v682 = vadd.f32 %v680, %v681
  %v683 = vrot.slane %v682, 1
  %v684 = vadd.f32 %v682, %v683
  %v685 = vsel %vm69, %v647, 0.0
  %v686 = vrot.slane %v685, 4
  %v687 = vadd.f32 %v685, %v686
  %v688 = vrot.slane %v687, 2
  %v689 = vadd.f32 %v687, %v688
  %v690 = vrot.slane %v689, 1
  %v691 = vadd.f32 %v689, %v690
  %v692 = vsel %vm69, %v648, 0.0
  %v693 = vrot.slane %v692, 4
  %v694 = vadd.f32 %v692, %v693
  %v695 = vrot.slane %v694, 2
  %v696 = vadd.f32 %v694, %v695
  %v697 = vrot.slane %v696, 1
  %v698 = vadd.f32 %v696, %v697
  %v699 = vsel %vm69, %v649, 0.0
  %v700 = vrot.slane %v699, 4
  %v701 = vadd.f32 %v699, %v700
  %v702 = vrot.slane %v701, 2
  %v703 = vadd.f32 %v701, %v702
  %v704 = vrot.slane %v703, 1
  %v705 = vadd.f32 %v703, %v704
  %v714 = vsel %vm558, %v663, %v656
  %v715 = vsel %vm560, %v670, %v714
  %v716 = vsel %vm562, %v677, %v715
  %v717 = vsel %vm564, %v684, %v716
  %v718 = vsel %vm566, %v691, %v717
  %v719 = vsel %vm568, %v698, %v718
  %v720 = vsel %vm570, %v705, %v719
  %721 = vrot.lane.b32.xlu0 %v720, 32
  %v722 = vpop.permute.xlu0 %721
  %v724 = vsel %vm155, %v140, %v722
  %v725 = vld [vmem:[%s7] sm:$0xff]
  %v726 = vld [vmem:[%s7 + $0x8] sm:$0xff]
  %v727 = vld [vmem:[%s7 + $0x10] sm:$0xff]
  %v728 = vld [vmem:[%s7 + $0x18] sm:$0xff]
  %v729 = vld [vmem:[%s7 + $0x20] sm:$0xff]
  %v730 = vld [vmem:[%s7 + $0x28] sm:$0xff]
  %v731 = vld [vmem:[%s7 + $0x30] sm:$0xff]
  %v732 = vld [vmem:[%s7 + $0x38] sm:$0xff]
  %v733 = vld [vmem:[%s7 + $0x40] sm:$0xff]
  %v734 = vld [vmem:[%s7 + $0x48] sm:$0xff]
  %v735 = vld [vmem:[%s7 + $0x50] sm:$0xff]
  %v736 = vld [vmem:[%s7 + $0x58] sm:$0xff]
  %v738 = vlaneseq
  %v739 = vshrl.u32 %v738, 7
  %v740 = vsub.s32 0, %v739
  %v741 = vrot.slane %v39, %v740
  %vm743 = vcmask 785408
  %v745 = vsel %vm743, %v724, 0
  %747 = vmatprep.subr.mxu0 0.0
  %748 = vmatpush1.msra.mxu0 %v725
  %749 = vmatprep.subr.mxu0 0.0
  %750 = vmatpush1.msra.mxu0 %v726
  %751 = vmatprep.subr.mxu0 0.0
  %752 = vmatpush1.msra.mxu0 %v727
  %753 = vmatprep.subr.mxu0 0.0
  %754 = vmatpush1.msra.mxu0 %v728
  %755 = vmatprep.subr.mxu0 0.0
  %756 = vmatpush1.msra.mxu0 %v729
  %757 = vmatprep.subr.mxu0 0.0
  %758 = vmatpush1.msra.mxu0 %v730
  %759 = vmatprep.subr.mxu0 0.0
  %760 = vmatpush1.msra.mxu0 %v731
  %761 = vmatprep.subr.mxu0 0.0
  %762 = vmatpush1.msra.mxu0 %v732
  %763 = vmatprep.subr.mxu0 0.0
  %764 = vmatpush1.msra.mxu0 %v733
  %765 = vmatprep.subr.mxu0 0.0
  %766 = vmatpush1.msra.mxu0 %v734
  %767 = vmatprep.subr.mxu0 0.0
  %768 = vmatpush1.msra.mxu0 %v735
  %769 = vmatprep.subr.mxu0 0.0
  %770 = vmatpush1.msra.mxu0 %v736
  %771 = vmatprep.subr.mxu0 0.0
  %772 = vmatpush1.msra.mxu0 0.0
  %773 = vmatprep.subr.mxu0 0.0
  %774 = vmatpush1.msra.mxu0 0.0
  %775 = vmatprep.subr.mxu0 0.0
  %776 = vmatpush1.msra.mxu0 0.0
  %777 = vmatprep.subr.mxu0 0.0
  %778 = vmatpush1.msra.mxu0 0.0
  %779 = vmatprep.subr.mxu0 0.0
  %780 = vmatpush1.msra.mxu0 0.0
  %781 = vmatprep.subr.mxu0 0.0
  %782 = vmatpush1.msra.mxu0 0.0
  %783 = vmatprep.subr.mxu0 0.0
  %784 = vmatpush1.msra.mxu0 0.0
  %785 = vmatprep.subr.mxu0 0.0
  %786 = vmatpush1.msra.mxu0 0.0
  %787 = vmatprep.subr.mxu0 0.0
  %788 = vmatpush1.msra.mxu0 0.0
  %789 = vmatprep.subr.mxu0 0.0
  %790 = vmatpush1.msra.mxu0 0.0
  %791 = vmatprep.subr.mxu0 0.0
  %792 = vmatpush1.msra.mxu0 0.0
  %793 = vmatprep.subr.mxu0 0.0
  %794 = vmatpush1.msra.mxu0 0.0
  %795 = vmatprep.subr.mxu0 0.0
  %796 = vmatpush1.msra.mxu0 0.0
  %797 = vmatprep.subr.mxu0 0.0
  %798 = vmatpush1.msra.mxu0 0.0
  %799 = vmatprep.subr.mxu0 0.0
  %800 = vmatpush1.msra.mxu0 0.0
  %801 = vmatprep.subr.mxu0 0.0
  %802 = vmatpush1.msra.mxu0 0.0
  %803 = vmatprep.subr.mxu0 0.0
  %804 = vmatpush1.msra.mxu0 0.0
  %805 = vmatprep.subr.mxu0 0.0
  %806 = vmatpush1.msra.mxu0 0.0
  %807 = vmatprep.subr.mxu0 0.0
  %808 = vmatpush1.msra.mxu0 0.0
  %809 = vmatprep.subr.mxu0 0.0
  %810 = vmatpush1.msra.mxu0 0.0
  %811 = vmatprep.mubr.f32.mxu0 0.0
  %812 = vmatmul.mubr.f32.gmra.mrb[0].mxu0 %v745
  %v813 = vpop.f32.mrb[0].mxu0
  %v814 = vadd.f32 %v741, %v813
  %v815 = vpop.f32.mrb[0].mxu0
  %816 = vdwg.mxu0
  %v817 = vld [vmem:[%s8] sm:$0xff]
  %v818 = vld [vmem:[%s8 + $0x8] sm:$0xff]
  %v819 = vld [vmem:[%s8 + $0x10] sm:$0xff]
  %v820 = vld [vmem:[%s8 + $0x18] sm:$0xff]
  %v822 = vlaneseq
  %v823 = vshrl.u32 %v822, 7
  %v824 = vsub.s32 0, %v823
  %v825 = vrot.slane %v40, %v824
  %827 = vmatprep.subr.mxu0 0.0
  %828 = vmatpush1.msra.mxu0 %v817
  %829 = vmatprep.subr.mxu0 0.0
  %830 = vmatpush1.msra.mxu0 %v818
  %831 = vmatprep.subr.mxu0 0.0
  %832 = vmatpush1.msra.mxu0 %v819
  %833 = vmatprep.subr.mxu0 0.0
  %834 = vmatpush1.msra.mxu0 %v820
  %835 = vmatprep.subr.mxu0 0.0
  %836 = vmatpush1.msra.mxu0 0.0
  %837 = vmatprep.subr.mxu0 0.0
  %838 = vmatpush1.msra.mxu0 0.0
  %839 = vmatprep.subr.mxu0 0.0
  %840 = vmatpush1.msra.mxu0 0.0
  %841 = vmatprep.subr.mxu0 0.0
  %842 = vmatpush1.msra.mxu0 0.0
  %843 = vmatprep.subr.mxu0 0.0
  %844 = vmatpush1.msra.mxu0 0.0
  %845 = vmatprep.subr.mxu0 0.0
  %846 = vmatpush1.msra.mxu0 0.0
  %847 = vmatprep.subr.mxu0 0.0
  %848 = vmatpush1.msra.mxu0 0.0
  %849 = vmatprep.subr.mxu0 0.0
  %850 = vmatpush1.msra.mxu0 0.0
  %851 = vmatprep.subr.mxu0 0.0
  %852 = vmatpush1.msra.mxu0 0.0
  %853 = vmatprep.subr.mxu0 0.0
  %854 = vmatpush1.msra.mxu0 0.0
  %855 = vmatprep.subr.mxu0 0.0
  %856 = vmatpush1.msra.mxu0 0.0
  %857 = vmatprep.subr.mxu0 0.0
  %858 = vmatpush1.msra.mxu0 0.0
  %859 = vmatprep.subr.mxu0 0.0
  %860 = vmatpush1.msra.mxu0 0.0
  %861 = vmatprep.subr.mxu0 0.0
  %862 = vmatpush1.msra.mxu0 0.0
  %863 = vmatprep.subr.mxu0 0.0
  %864 = vmatpush1.msra.mxu0 0.0
  %865 = vmatprep.subr.mxu0 0.0
  %866 = vmatpush1.msra.mxu0 0.0
  %867 = vmatprep.subr.mxu0 0.0
  %868 = vmatpush1.msra.mxu0 0.0
  %869 = vmatprep.subr.mxu0 0.0
  %870 = vmatpush1.msra.mxu0 0.0
  %871 = vmatprep.subr.mxu0 0.0
  %872 = vmatpush1.msra.mxu0 0.0
  %873 = vmatprep.subr.mxu0 0.0
  %874 = vmatpush1.msra.mxu0 0.0
  %875 = vmatprep.subr.mxu0 0.0
  %876 = vmatpush1.msra.mxu0 0.0
  %877 = vmatprep.subr.mxu0 0.0
  %878 = vmatpush1.msra.mxu0 0.0
  %879 = vmatprep.subr.mxu0 0.0
  %880 = vmatpush1.msra.mxu0 0.0
  %881 = vmatprep.subr.mxu0 0.0
  %882 = vmatpush1.msra.mxu0 0.0
  %883 = vmatprep.subr.mxu0 0.0
  %884 = vmatpush1.msra.mxu0 0.0
  %885 = vmatprep.subr.mxu0 0.0
  %886 = vmatpush1.msra.mxu0 0.0
  %887 = vmatprep.subr.mxu0 0.0
  %888 = vmatpush1.msra.mxu0 0.0
  %889 = vmatprep.subr.mxu0 0.0
  %890 = vmatpush1.msra.mxu0 0.0
  %891 = vmatprep.mubr.f32.mxu0 0.0
  %892 = vmatmul.mubr.f32.gmra.mrb[0].mxu0 %v157
  %v893 = vpop.f32.mrb[0].mxu0
  %v894 = vadd.f32 %v825, %v893
  %v895 = vpop.f32.mrb[0].mxu0
  %896 = vdwg.mxu0
  %v897 = vadd.f32 %v814, %v894
  %v898 = vxor.u32 %v897, 2147483648
  %v899 = vmul.f32 %v898, 1.442695
  %v900 = vpow.pop %v899
  %v901 = vadd.f32 %v900, 1.0
  %v902 = vrcp.pop %v901
  %v903 = vmul.f32 1.0, %v902
  %905 = vrot.lane.b32.xlu0 %v894, 64
  %v906 = vpop.permute.xlu0 %905
  %v908 = vmul.f32 %v903, %v906
  %910 = vrot.lane.b32.xlu0 %v908, 64
  %v911 = vpop.permute.xlu0 %910
  %v913 = vadd.f32 %v814, %v911
  %v914 = vtanh.pop %v913
  %v915 = vsub.f32 1.0, %v903
  %917 = vrot.lane.b32.xlu0 %v914, 96
  %v918 = vpop.permute.xlu0 %917
  %v920 = vmul.f32 %v915, %v918
  %921 = vrot.lane.b32.xlu0 %v42, 32
  %v922 = vpop.permute.xlu0 %921
  %v924 = vmul.f32 %v903, %v922
  %v925 = vadd.f32 %v920, %v924
  %927 = vrot.lane.b32.xlu0 %v925, 96
  %v928 = vpop.permute.xlu0 %927
  %931 = vrot.lane.b32.xlu0 %v140, 96
  %v932 = vpop.permute.xlu0 %931
  %v934 = vsel %vm155, %v928, %v722
  %v935 = vsel %vm743, %v934, %v932
  %v936 = vld [vmem:[%s9] sm:$0xff]
  %v937 = vld [vmem:[%s9 + $0x8] sm:$0xff]
  %v938 = vld [vmem:[%s9 + $0x10] sm:$0xff]
  %v939 = vld [vmem:[%s9 + $0x18] sm:$0xff]
  %v940 = vld [vmem:[%s9 + $0x20] sm:$0xff]
  %v941 = vld [vmem:[%s9 + $0x28] sm:$0xff]
  %v942 = vld [vmem:[%s9 + $0x30] sm:$0xff]
  %v943 = vld [vmem:[%s9 + $0x38] sm:$0xff]
  %v944 = vld [vmem:[%s9 + $0x40] sm:$0xff]
  %v945 = vld [vmem:[%s9 + $0x48] sm:$0xff]
  %v946 = vld [vmem:[%s9 + $0x50] sm:$0xff]
  %v947 = vld [vmem:[%s9 + $0x58] sm:$0xff]
  %v948 = vld [vmem:[%s9 + $0x60] sm:$0xff]
  %v949 = vld [vmem:[%s9 + $0x68] sm:$0xff]
  %v950 = vld [vmem:[%s9 + $0x70] sm:$0xff]
  %v951 = vld [vmem:[%s9 + $0x78] sm:$0xff]
  %v953 = vlaneseq
  %v954 = vshrl.u32 %v953, 7
  %v955 = vsub.s32 0, %v954
  %v956 = vrot.slane %v41, %v955
  %958 = vmatprep.subr.mxu0 0.0
  %959 = vmatpush1.msra.mxu0 %v936
  %960 = vmatprep.subr.mxu0 0.0
  %961 = vmatpush1.msra.mxu0 %v937
  %962 = vmatprep.subr.mxu0 0.0
  %963 = vmatpush1.msra.mxu0 %v938
  %964 = vmatprep.subr.mxu0 0.0
  %965 = vmatpush1.msra.mxu0 %v939
  %966 = vmatprep.subr.mxu0 0.0
  %967 = vmatpush1.msra.mxu0 %v940
  %968 = vmatprep.subr.mxu0 0.0
  %969 = vmatpush1.msra.mxu0 %v941
  %970 = vmatprep.subr.mxu0 0.0
  %971 = vmatpush1.msra.mxu0 %v942
  %972 = vmatprep.subr.mxu0 0.0
  %973 = vmatpush1.msra.mxu0 %v943
  %974 = vmatprep.subr.mxu0 0.0
  %975 = vmatpush1.msra.mxu0 %v944
  %976 = vmatprep.subr.mxu0 0.0
  %977 = vmatpush1.msra.mxu0 %v945
  %978 = vmatprep.subr.mxu0 0.0
  %979 = vmatpush1.msra.mxu0 %v946
  %980 = vmatprep.subr.mxu0 0.0
  %981 = vmatpush1.msra.mxu0 %v947
  %982 = vmatprep.subr.mxu0 0.0
  %983 = vmatpush1.msra.mxu0 %v948
  %984 = vmatprep.subr.mxu0 0.0
  %985 = vmatpush1.msra.mxu0 %v949
  %986 = vmatprep.subr.mxu0 0.0
  %987 = vmatpush1.msra.mxu0 %v950
  %988 = vmatprep.subr.mxu0 0.0
  %989 = vmatpush1.msra.mxu0 %v951
  %990 = vmatprep.subr.mxu0 0.0
  %991 = vmatpush1.msra.mxu0 0.0
  %992 = vmatprep.subr.mxu0 0.0
  %993 = vmatpush1.msra.mxu0 0.0
  %994 = vmatprep.subr.mxu0 0.0
  %995 = vmatpush1.msra.mxu0 0.0
  %996 = vmatprep.subr.mxu0 0.0
  %997 = vmatpush1.msra.mxu0 0.0
  %998 = vmatprep.subr.mxu0 0.0
  %999 = vmatpush1.msra.mxu0 0.0
  %1000 = vmatprep.subr.mxu0 0.0
  %1001 = vmatpush1.msra.mxu0 0.0
  %1002 = vmatprep.subr.mxu0 0.0
  %1003 = vmatpush1.msra.mxu0 0.0
  %1004 = vmatprep.subr.mxu0 0.0
  %1005 = vmatpush1.msra.mxu0 0.0
  %1006 = vmatprep.subr.mxu0 0.0
  %1007 = vmatpush1.msra.mxu0 0.0
  %1008 = vmatprep.subr.mxu0 0.0
  %1009 = vmatpush1.msra.mxu0 0.0
  %1010 = vmatprep.subr.mxu0 0.0
  %1011 = vmatpush1.msra.mxu0 0.0
  %1012 = vmatprep.subr.mxu0 0.0
  %1013 = vmatpush1.msra.mxu0 0.0
  %1014 = vmatprep.subr.mxu0 0.0
  %1015 = vmatpush1.msra.mxu0 0.0
  %1016 = vmatprep.subr.mxu0 0.0
  %1017 = vmatpush1.msra.mxu0 0.0
  %1018 = vmatprep.subr.mxu0 0.0
  %1019 = vmatpush1.msra.mxu0 0.0
  %1020 = vmatprep.subr.mxu0 0.0
  %1021 = vmatpush1.msra.mxu0 0.0
  %1022 = vmatprep.mubr.f32.mxu0 0.0
  %1023 = vmatmul.mubr.f32.gmra.mrb[0].mxu0 %v935
  %v1024 = vpop.f32.mrb[0].mxu0
  %v1025 = vadd.f32 %v956, %v1024
  %v1026 = vpop.f32.mrb[0].mxu0
  %1027 = vdwg.mxu0
  %1028 = vrot.lane.b32.xlu0 %v925, 32
  %v1029 = vpop.permute.xlu0 %1028
  %1032 = vrot.lane.b32.xlu0 %v585, 96
  %v1033 = vpop.permute.xlu0 %1032
  %v1035 = vsel %vm69, %v1025, %v1029
  %v1036 = vsel %vm743, %v1035, %v1033
  %vm1037 = vcmask 850944
  %v1038 = vsel %vm1037, %v1036, 0.0
  %1039 = vst [vmem:[%s11] sm:$0xff] %v1038
  // Predicated region
  $region46: #{decoder_forward.1} parent=0 // pred_check
    _
  $region47: #{decoder_forward.1} parent=0 // pred_check_branch
    %1041 = sbr.rel (0) target = $region49
  $region48: #{decoder_forward.1} parent=0 // pred_region
    _
  $region49: #{decoder_forward.1} parent=0 // pred_fallthru
    _
  // Predicated region
  $region50: #{decoder_forward.1} parent=0 // pred_check
    _
  $region51: #{decoder_forward.1} parent=0 // pred_check_branch
    %1043 = sbr.rel (0) target = $region53
  $region52: #{decoder_forward.1} parent=0 // pred_region
    _
  $region53: #{decoder_forward.1} parent=0 // pred_fallthru
    _

</llo_original>
